<compile_context>
chip_gen: v6e
topology: v6e:2x2x1
jax: 0.10.0
libtpu: 0.0.40
codegen_flags: <defaults>
</compile_context>

<pallas_src>
import jax
import jax.numpy as jnp
from jax.experimental import pallas as pl
from jax.experimental.pallas import tpu as pltpu


_LANE = 128
_MAX_BLOCK_ROWS = 2048   # 2048 x 128 x 4 B = 1 MiB per block (v7x-safe when double-buffered)
_MIN_BLOCK_ROWS = 256    # 128 KiB per block floor so per-grid-step overhead stays negligible
_TARGET_STEPS = 8        # enough parallel steps for v7x 2-TC sharding + DMA/compute overlap
_SMALL_N = 1024          # below one dense vreg-row of work, let XLA fuse plain JAX instead


def hybrid_kernel(x_ref, o_ref):
    # x_ref: (1, block_rows, 128) thetas (any float dtype); o_ref: (block_rows, 128) f32.
    # Ideal expectation of the measured bit for H -> RY(theta) on |0>:
    #   P(1) = (sin(theta/2) + cos(theta/2))^2 / 2 = (1 + sin(theta)) / 2
    theta = x_ref[0].astype(jnp.float32)            # sublane-dense (block_rows, 128) tile
    o_ref[...] = 0.5 * (1.0 + jnp.sin(theta))       # pure VPU work, no MXU/XLU


def _pick_block_rows(rows):
    """Block height (sublanes): multiple of 8, 128 KiB..1 MiB per block, ~8 grid steps
    when the slab is large enough.  Small slabs use one full-extent block."""
    if rows <= _MIN_BLOCK_ROWS:
        return rows                                  # block == full dim (exempt from 8-div rule)
    per_step = pl.cdiv(rows, _TARGET_STEPS)
    per_step = max(_MIN_BLOCK_ROWS, min(_MAX_BLOCK_ROWS, per_step))
    return ((per_step + 7) // 8) * 8                 # sublane-align; ragged last block is masked


def hybrid_forward(x):
    """x: (B, N) array of rotation angles theta.  Returns (1, N) float32 expectations.

    Only row 0 is consumed, mirroring `input[0].tolist()` in the PyTorch reference.
    """
    b, n = x.shape

    if n < _SMALL_N:
        # Canonical tiny case (Qiskit tutorial uses N=1): one vreg of work — a kernel
        # launch would be 100% overhead, so let XLA fuse it with neighboring ops.
        return 0.5 * (1.0 + jnp.sin(x[0:1, :].astype(jnp.float32)))

    rows = pl.cdiv(n, _LANE)
    if n % _LANE == 0:
        # Contiguous row-major reshape: metadata-only, no HBM copy.  The BlockSpec
        # index_map below reads only batch row 0, so no wrapper-side slice is needed.
        x3 = x.reshape(b, rows, _LANE)
    else:
        # Irregular N: pad row 0 up to a multiple of 128 so stores stay unmasked.
        pad = rows * _LANE - n
        x3 = jnp.pad(x[0:1, :], ((0, 0), (0, pad))).reshape(1, rows, _LANE)

    block_rows = _pick_block_rows(rows)
    grid = (pl.cdiv(rows, block_rows),)

    slab = pl.pallas_call(
        hybrid_kernel,
        out_shape=jax.ShapeDtypeStruct((rows, _LANE), jnp.float32),
        grid=grid,
        in_specs=[pl.BlockSpec((1, block_rows, _LANE), lambda i: (0, i, 0))],
        out_specs=pl.BlockSpec((block_rows, _LANE), lambda i: (i, 0)),
        compiler_params=pltpu.CompilerParams(
            dimension_semantics=("parallel",),
        ),
    )(x3)

    return slab.reshape(1, rows * _LANE)[:, :n]


if __name__ == "__main__":
    key = jax.random.PRNGKey(0)
    k1, k2, k3 = jax.random.split(key, 3)

    # Canonical small shape (batch=2 rows of thetas, 8 angles) -> fused plain-JAX path.
    x_small = jax.random.uniform(k1, (2, 8), jnp.float32, 0.0, 2.0 * jnp.pi)
    out_small = jax.block_until_ready(hybrid_forward(x_small))
    ref_small = 0.5 * (1.0 + jnp.sin(x_small[0:1, :]))
    assert out_small.shape == (1, 8)
    assert jnp.allclose(out_small, ref_small, atol=1e-5)

    # Single-step Pallas path (rows = 16, one full-extent sublane-dense block).
    x_med = jax.random.uniform(k2, (2, 2048), jnp.float32, 0.0, 2.0 * jnp.pi)
    out_med = jax.block_until_ready(hybrid_forward(x_med))
    ref_med = 0.5 * (1.0 + jnp.sin(x_med[0:1, :]))
    assert out_med.shape == (1, 2048)
    assert jnp.allclose(out_med, ref_med, atol=1e-5)

    # Multi-step parallel grid (rows = 512 -> 2 blocks of 256x128 = 128 KiB each).
    x_big = jax.random.uniform(k3, (2, 65536), jnp.float32, 0.0, 2.0 * jnp.pi)
    out_big = jax.block_until_ready(hybrid_forward(x_big))
    ref_big = 0.5 * (1.0 + jnp.sin(x_big[0:1, :]))
    assert out_big.shape == (1, 65536)
    assert jnp.allclose(out_big, ref_big, atol=1e-5)

    print("KERNEL_OK")
</pallas_src>

<mosaic_0001>
module attributes {stable_mosaic.version = 11 : i64} {
  func.func @hybrid_kernel(%arg0: i32, %arg1: memref<1x16x128xf32, #tpu.memory_space<vmem>>, %arg2: memref<16x128xf32, #tpu.memory_space<vmem>>) attributes {dimension_semantics = [#tpu.dimension_semantics<parallel>], iteration_bounds = array<i64: 1>, scalar_prefetch = 0 : i64, scratch_operands = 0 : i64, tpu.core_type = #tpu.core_type<tc>, window_params = [{transform_indices = @transform_0, window_bounds = array<i64: 1, 16, 128>}, {transform_indices = @transform_1, window_bounds = array<i64: 16, 128>}]} {
    %c0 = arith.constant 0 : index
    %c0_0 = arith.constant 0 : index
    %c0_1 = arith.constant 0 : index
    %0 = vector.load %arg1[%c0, %c0_0, %c0_1] : memref<1x16x128xf32, #tpu.memory_space<vmem>>, vector<1x16x128xf32>
    %1 = vector.shape_cast %0 : vector<1x16x128xf32> to vector<16x128xf32>
    %2 = math.sin %1 : vector<16x128xf32>
    %cst = arith.constant 1.000000e+00 : f32
    %3 = vector.broadcast %cst : f32 to vector<16x128xf32>
    %4 = arith.addf %3, %2 : vector<16x128xf32>
    %cst_2 = arith.constant 5.000000e-01 : f32
    %5 = vector.broadcast %cst_2 : f32 to vector<16x128xf32>
    %6 = arith.mulf %5, %4 : vector<16x128xf32>
    %c0_3 = arith.constant 0 : index
    %c0_4 = arith.constant 0 : index
    %7 = vector.load %arg2[%c0_3, %c0_4] : memref<16x128xf32, #tpu.memory_space<vmem>>, vector<16x128xf32>
    tpu.vector_store %arg2[%c0_3, %c0_4], %6 {strides = array<i32>} : memref<16x128xf32, #tpu.memory_space<vmem>>, vector<16x128xf32>,
    return
  }
  func.func @transform_0(%arg0: i32) -> (i32, i32, i32) {
    %c0_i32 = arith.constant 0 : i32
    %c0_i32_0 = arith.constant 0 : i32
    %c0_i32_1 = arith.constant 0 : i32
    return %c0_i32, %arg0, %c0_i32_0 : i32, i32, i32
  }
  func.func @transform_1(%arg0: i32) -> (i32, i32) {
    %c0_i32 = arith.constant 0 : i32
    %c0_i32_0 = arith.constant 0 : i32
    return %arg0, %c0_i32 : i32, i32
  }
}

</mosaic_0001>

<llo_original>
// kernel: tpu_custom_call.1
$region0: #{tpu_custom_call.1}
  #allocation0 [shape = 'u32[]', space=smem, size = 0x4, offset = 0x4, fixed_abs, tag = 'smem constant byte address 0x4 - core index']
  #allocation1 [shape = 'u32[144,128]{1,0:T(1,128)}', space=vmem, size = 0x12000, scoped, tag = 'internal scratch']
  %s0 = inlined_call_operand.hbm [shape: f32[2,16,128], index: 0, kind: input, shape index: {}]
  %s1 = inlined_call_operand.hbm [shape: f32[16,128], index: 1, kind: output, shape index: {}]
  %s2 = sld [smem:[#allocation0]]
  $region18: #{tpu_custom_call.1} parent=0
    _
  %s4 = ssub.s32 1, %s2
  %s5 = scalar_select 0, %s4, %s2
  $region1: #{tpu_custom_call.1} parent=0
    #allocation2 [shape = 'u8[8192]{0}', space=vmem, size = 0x2000, scoped, tag = 'input window, operand 0, single buffered']
    #allocation3 [shape = 's32[1]{0}', space=sflag, size = 0x4, scoped, tag = 'scoped memory for tpu_custom_call.1']
    #allocation4 [shape = 's32[1]{0}', space=sflag, size = 0x4, scoped, tag = 'scoped memory for tpu_custom_call.1']
    #allocation5 [shape = 'u8[8192]{0}', space=vmem, size = 0x2000, scoped, tag = 'output window, operand 0, single buffered']
    %6 = vsyncpa [#allocation3], 0
    %7 = vsyncpa [#allocation4], 0
    // Predicated region
    $region2: #{tpu_custom_call.1} parent=1 // pred_check
      _
    $region3: #{tpu_custom_call.1} parent=1 // pred_check_branch
      %9 = sbr.rel (0) target = $region5
    $region4: #{tpu_custom_call.1} parent=1 // pred_region
      %s11 = ssub.s32 256, 256
      %12 = vsyncadd [#allocation3], %s11
      %s13 = sshll.u32 [#allocation2], 4
      %s14 = int_to_ptr.vmem [resolvable:$true] %s13
      %19 = dma.hbm_to_vmem [thread:$0]  %s0, 256, %s14, [#allocation3], 128, 128, 8
    $region5: #{tpu_custom_call.1} parent=1 // pred_fallthru
      _
    // Predicated region
    $region6: #{tpu_custom_call.1} parent=1 // pred_check
      _
    $region7: #{tpu_custom_call.1} parent=1 // pred_check_branch
      %21 = sbr.rel (0) target = $region9
    $region8: #{tpu_custom_call.1} parent=1 // pred_region
      %22 = dma.done [#allocation3], 256
    $region9: #{tpu_custom_call.1} parent=1 // pred_fallthru
      _
    %v23 = vld [vmem:[#allocation2] sm:$0xff]
    %v24 = vld [vmem:[#allocation2 + $0x8] sm:$0xff]
    %v25 = vand.u32 2147483647, %v23
    %vm26 = vcmp.le.f32.partialorder %v25, 0.7853982
    %vm27 = vcmp.lt.s32.totalorder %v23, 0
    %v28 = vand.u32 %v23, 2139095040
    %v29 = vshrl.u32 %v28, 23
    %v30 = vsub.s32 %v29, 127
    %v31 = vand.u32 2147483647, %v23
    %v32 = vand.u32 %v31, 8388607
    %v33 = vor.u32 %v32, 8388608
    %v34 = vsub.s32 0, %v33
    %v35 = vadd.s32 %v30, 1
    %vm36 = vcmp.gt.s32.totalorder %v35, 0
    %v37 = vsel %vm36, %v35, 0
    %v38 = vshrl.u32 %v37, 5
    %v39 = vand.u32 %v37, 31
    %v40 = vsub.s32 32, %v39
    %v41 = vshrl.u32 683565275, %v40
    %v42 = vshll.u32 683565275, %v39
    %v43 = vshrl.u32 2475754826, %v40
    %v44 = vor.u32 %v42, %v43
    %v45 = vshll.u32 2475754826, %v39
    %v46 = vshrl.u32 2131351028, %v40
    %v47 = vor.u32 %v45, %v46
    %v48 = vshll.u32 2131351028, %v39
    %v49 = vshrl.u32 2102212464, %v40
    %v50 = vor.u32 %v48, %v49
    %v51 = vshll.u32 2102212464, %v39
    %v52 = vshrl.u32 920167782, %v40
    %v53 = vor.u32 %v51, %v52
    %v54 = vshll.u32 920167782, %v39
    %v55 = vshrl.u32 1326507024, %v40
    %v56 = vor.u32 %v54, %v55
    %vm57 = vcmp.lt.s32.totalorder %v38, 1
    %vm58 = vcmp.lt.s32.totalorder %v38, 2
    %vm59 = vcmp.lt.s32.totalorder %v38, 3
    %vm60 = vcmp.lt.s32.totalorder %v38, 4
    %v61 = vsel %vm57, %v41, %v44
    %v62 = vsel %vm60, %v50, 2102212464
    %v63 = vsel %vm59, %v47, %v62
    %v64 = vsel %vm58, %v61, %v63
    %v65 = vsel %vm57, %v44, %v47
    %v66 = vsel %vm60, %v53, 920167782
    %v67 = vsel %vm59, %v50, %v66
    %v68 = vsel %vm58, %v65, %v67
    %v69 = vsel %vm57, %v47, %v50
    %v70 = vsel %vm60, %v56, 1326507024
    %v71 = vsel %vm59, %v53, %v70
    %v72 = vsel %vm58, %v69, %v71
    %v73 = vshll.u32 %v33, 8
    %v74 = vmul.u32.u64.compose %v73, %v72
    %v75 = vextract.low.u32 %v74
    %v76 = vextract.high.u32 %v74
    %v77 = vmul.u32.u64.compose %v73, %v68
    %v78 = vextract.low.u32 %v77
    %v79 = vextract.high.u32 %v77
    %v80 = vmul.u32 %v73, %v64
    %v81 = vadd.s32 %v76, %v78
    %vm82 = vc.u32 %v76, %v78
    %v83 = vadd.s32 %v79, 1
    %v84 = vsel %vm82, %v83, %v79
    %v85 = vadd.s32 %v80, %v84
    %v86 = vadd.s32 %v85, 536870912
    %v87 = vshrl.u32 %v86, 30
    %v88 = vshll.u32 %v87, 30
    %v89 = vsub.s32 %v85, %v88
    %vm90 = vcmp.lt.s32.totalorder %v89, 0
    %v91 = vsub.s32 0, %v89
    %v92 = vsel %vm90, %v91, %v89
    %v93 = vclz %v92
    %v94 = vsub.s32 %v93, 2
    %vm95 = vcmp.gt.s32.totalorder 0, %v94
    %v96 = vsel %vm95, 0, %v94
    %v97 = vsub.s32 32, %v96
    %v98 = vshll.u32 %v89, %v96
    %v99 = vshrl.u32 %v81, %v97
    %v100 = vor.u32 %v98, %v99
    %v101 = vsub.s32 4294967266, %v96
    %v102 = vadd.s32 %v101, 127
    %v103 = vshll.u32 %v102, 23
    %v104 = vor.u32 4788187, %v103
    %v105 = vand.u32 2147483647, %v104
    %v107 = vcvt.s32.f32 %v100
    %v108 = vmul.f32 %v107, %v105
    %v109 = vxor.u32 %v108, 2147483648
    %v110 = vsel %vm27, %v109, %v108
    %v111 = vsub.s32 4, %v87
    %v112 = vsel %vm27, %v111, %v87
    %v113 = vsel %vm26, %v23, %v110
    %v114 = vsel %vm26, 0, %v112
    %v115 = vcosq.f32.pop %v113
    %v116 = vsinq.f32.pop %v113
    %vm117 = vweird.f32 %v23
    %v118 = vadd.s32 %v114, 3
    %v119 = vand.u32 %v118, 3
    %vm120 = vcmp.lt.s32.totalorder %v119, 2
    %vm121 = vcmp.eq.s32.totalorder %v119, 0
    %v122 = vxor.u32 %v116, 2147483648
    %v123 = vsel %vm121, %v115, %v122
    %vm124 = vcmp.eq.s32.totalorder %v119, 2
    %v125 = vxor.u32 %v115, 2147483648
    %v126 = vsel %vm124, %v125, %v116
    %v127 = vsel %vm120, %v123, %v126
    %v128 = vsel %vm117, nan, %v127
    %v129 = vand.u32 2147483647, %v24
    %vm130 = vcmp.le.f32.partialorder %v129, 0.7853982
    %vm131 = vcmp.lt.s32.totalorder %v24, 0
    %v132 = vand.u32 %v24, 2139095040
    %v133 = vshrl.u32 %v132, 23
    %v134 = vsub.s32 %v133, 127
    %v135 = vand.u32 2147483647, %v24
    %v136 = vand.u32 %v135, 8388607
    %v137 = vor.u32 %v136, 8388608
    %v138 = vsub.s32 0, %v137
    %v139 = vadd.s32 %v134, 1
    %vm140 = vcmp.gt.s32.totalorder %v139, 0
    %v141 = vsel %vm140, %v139, 0
    %v142 = vshrl.u32 %v141, 5
    %v143 = vand.u32 %v141, 31
    %v144 = vsub.s32 32, %v143
    %v145 = vshrl.u32 683565275, %v144
    %v146 = vshll.u32 683565275, %v143
    %v147 = vshrl.u32 2475754826, %v144
    %v148 = vor.u32 %v146, %v147
    %v149 = vshll.u32 2475754826, %v143
    %v150 = vshrl.u32 2131351028, %v144
    %v151 = vor.u32 %v149, %v150
    %v152 = vshll.u32 2131351028, %v143
    %v153 = vshrl.u32 2102212464, %v144
    %v154 = vor.u32 %v152, %v153
    %v155 = vshll.u32 2102212464, %v143
    %v156 = vshrl.u32 920167782, %v144
    %v157 = vor.u32 %v155, %v156
    %v158 = vshll.u32 920167782, %v143
    %v159 = vshrl.u32 1326507024, %v144
    %v160 = vor.u32 %v158, %v159
    %vm161 = vcmp.lt.s32.totalorder %v142, 1
    %vm162 = vcmp.lt.s32.totalorder %v142, 2
    %vm163 = vcmp.lt.s32.totalorder %v142, 3
    %vm164 = vcmp.lt.s32.totalorder %v142, 4
    %v165 = vsel %vm161, %v145, %v148
    %v166 = vsel %vm164, %v154, 2102212464
    %v167 = vsel %vm163, %v151, %v166
    %v168 = vsel %vm162, %v165, %v167
    %v169 = vsel %vm161, %v148, %v151
    %v170 = vsel %vm164, %v157, 920167782
    %v171 = vsel %vm163, %v154, %v170
    %v172 = vsel %vm162, %v169, %v171
    %v173 = vsel %vm161, %v151, %v154
    %v174 = vsel %vm164, %v160, 1326507024
    %v175 = vsel %vm163, %v157, %v174
    %v176 = vsel %vm162, %v173, %v175
    %v177 = vshll.u32 %v137, 8
    %v178 = vmul.u32.u64.compose %v177, %v176
    %v179 = vextract.low.u32 %v178
    %v180 = vextract.high.u32 %v178
    %v181 = vmul.u32.u64.compose %v177, %v172
    %v182 = vextract.low.u32 %v181
    %v183 = vextract.high.u32 %v181
    %v184 = vmul.u32 %v177, %v168
    %v185 = vadd.s32 %v180, %v182
    %vm186 = vc.u32 %v180, %v182
    %v187 = vadd.s32 %v183, 1
    %v188 = vsel %vm186, %v187, %v183
    %v189 = vadd.s32 %v184, %v188
    %v190 = vadd.s32 %v189, 536870912
    %v191 = vshrl.u32 %v190, 30
    %v192 = vshll.u32 %v191, 30
    %v193 = vsub.s32 %v189, %v192
    %vm194 = vcmp.lt.s32.totalorder %v193, 0
    %v195 = vsub.s32 0, %v193
    %v196 = vsel %vm194, %v195, %v193
    %v197 = vclz %v196
    %v198 = vsub.s32 %v197, 2
    %vm199 = vcmp.gt.s32.totalorder 0, %v198
    %v200 = vsel %vm199, 0, %v198
    %v201 = vsub.s32 32, %v200
    %v202 = vshll.u32 %v193, %v200
    %v203 = vshrl.u32 %v185, %v201
    %v204 = vor.u32 %v202, %v203
    %v205 = vsub.s32 4294967266, %v200
    %v206 = vadd.s32 %v205, 127
    %v207 = vshll.u32 %v206, 23
    %v208 = vor.u32 4788187, %v207
    %v209 = vand.u32 2147483647, %v208
    %v211 = vcvt.s32.f32 %v204
    %v212 = vmul.f32 %v211, %v209
    %v213 = vxor.u32 %v212, 2147483648
    %v214 = vsel %vm131, %v213, %v212
    %v215 = vsub.s32 4, %v191
    %v216 = vsel %vm131, %v215, %v191
    %v217 = vsel %vm130, %v24, %v214
    %v218 = vsel %vm130, 0, %v216
    %v219 = vcosq.f32.pop %v217
    %v220 = vsinq.f32.pop %v217
    %vm221 = vweird.f32 %v24
    %v222 = vadd.s32 %v218, 3
    %v223 = vand.u32 %v222, 3
    %vm224 = vcmp.lt.s32.totalorder %v223, 2
    %vm225 = vcmp.eq.s32.totalorder %v223, 0
    %v226 = vxor.u32 %v220, 2147483648
    %v227 = vsel %vm225, %v219, %v226
    %vm228 = vcmp.eq.s32.totalorder %v223, 2
    %v229 = vxor.u32 %v219, 2147483648
    %v230 = vsel %vm228, %v229, %v220
    %v231 = vsel %vm224, %v227, %v230
    %v232 = vsel %vm221, nan, %v231
    %v233 = vadd.f32 %v128, 1.0
    %v234 = vadd.f32 %v232, 1.0
    %v235 = vmul.f32 %v233, 0.5
    %v236 = vmul.f32 %v234, 0.5
    %237 = vst [vmem:[#allocation5] sm:$0xff] %v235
    %238 = vst [vmem:[#allocation5 + $0x8] sm:$0xff] %v236
    // Predicated region
    $region10: #{tpu_custom_call.1} parent=1 // pred_check
      _
    $region11: #{tpu_custom_call.1} parent=1 // pred_check_branch
      %240 = sbr.rel (0) target = $region13
    $region12: #{tpu_custom_call.1} parent=1 // pred_region
      %s242 = ssub.s32 256, 256
      %243 = vsyncadd [#allocation4], %s242
      %s244 = sshll.u32 [#allocation5], 4
      %s245 = int_to_ptr.vmem [resolvable:$true] %s244
      %250 = dma.vmem_to_hbm [thread:$0]  %s245, 256, %s1, [#allocation4], 128, 128, 8
    $region13: #{tpu_custom_call.1} parent=1 // pred_fallthru
      _
    // Predicated region
    $region14: #{tpu_custom_call.1} parent=1 // pred_check
      _
    $region15: #{tpu_custom_call.1} parent=1 // pred_check_branch
      %252 = sbr.rel (0) target = $region17
    $region16: #{tpu_custom_call.1} parent=1 // pred_region
      %253 = dma.done [#allocation4], 256
    $region17: #{tpu_custom_call.1} parent=1 // pred_fallthru
      _
    %254 = vsyncpa [#allocation3], 1
    %255 = vsyncpa [#allocation4], 1

</llo_original>
